<compile_context>
chip_gen: v7x
topology: tpu7x:2x2x1
jax: 0.10.0
libtpu: 0.0.40
codegen_flags: <defaults>
</compile_context>

<pallas_src>
import functools

import jax
import jax.numpy as jnp
from jax import lax
from jax.experimental import pallas as pl
from jax.experimental.pallas import tpu as pltpu


def _round_up(x, m):
    return ((x + m - 1) // m) * m


def _cdiv(a, b):
    return (a + b - 1) // b


# ----------------------------------------------------------------------------
# Fused matmul + BN-bias + activation kernel
# ----------------------------------------------------------------------------
def _apply_activation(y, activation):
    """Elementwise activation on the f32 accumulator (epilogue)."""
    if activation in ("relu", "R_LeakyReLU_ReLU", "R_Mish_ReLU"):
        # UniGrad variants have a plain ReLU forward.
        return jnp.maximum(y, 0.0)
    if activation == "LeakyReLU":
        return jnp.where(y > 0, y, 0.01 * y)
    if activation == "swish":
        # Numerically stable sigmoid via tanh (single EUP op, no overflow).
        return y * (0.5 * (jnp.tanh(0.5 * y) + 1.0))
    if activation == "mish":
        # mish(y) = y * tanh(softplus(y)) = y * e*(e+2) / (e*(e+2) + 2),
        # e = exp(y).  Clamp to avoid f32 overflow; for y >= 20, mish(y) ~= y.
        e = jnp.exp(jnp.minimum(y, 20.0))
        num = e * (e + 2.0)
        return y * (num / (num + 2.0))
    return y  # identity


def _make_kernel(activation):
    def kernel(x_ref, w_ref, bias_ref, o_ref, acc_ref):
        k = pl.program_id(2)

        @pl.when(k == 0)
        def _init():
            acc_ref[...] = jnp.zeros_like(acc_ref)

        acc_ref[...] += jnp.dot(
            x_ref[...], w_ref[...], preferred_element_type=jnp.float32
        )

        @pl.when(k == pl.num_programs(2) - 1)
        def _epilogue():
            # BN scale is already folded into the weights; only bias + act.
            y = acc_ref[...] + bias_ref[...]
            y = _apply_activation(y, activation)
            o_ref[...] = y.astype(o_ref.dtype)

    return kernel


def _fused_matmul_bn_act(patches, w_mat, bias, out_dtype, activation):
    """(M, K) @ (K, Np) + bias[Np] -> activation, on the MXU."""
    m, kd = patches.shape
    _, np_ = w_mat.shape  # already padded to a multiple of 128

    # ---- tile selection ----
    # N (output-channel) tile: lane-dense; prefer >= 256 on v6e/v7x MXUs.
    if np_ <= 1024:
        bn = np_
    elif np_ % 512 == 0:
        bn = 512
    elif np_ % 256 == 0:
        bn = 256
    else:
        bn = 128

    # K tile: full contraction dim when it fits (no HBM K padding);
    # otherwise 512-wide blocks with zero padding (correctness requires it).
    if kd <= 1024:
        bk = kd
        kp = kd
    else:
        bk = 512
        kp = _round_up(kd, bk)
        patches = jnp.pad(patches, ((0, 0), (0, kp - kd)))
        w_mat = jnp.pad(w_mat, ((0, kp - kd), (0, 0)))

    # M tile: multiple of 16 (bf16 sublane packing).  No HBM M padding; the
    # uneven edge block (if any) is masked by Pallas and sliced off later.
    bm = 1024 if m >= 1024 else _round_up(m, 16)
    # Keep >= 2 blocks on the parallel axes so both v7x TensorCores get work.
    if (_cdiv(m, bm) * (np_ // bn)) < 2 and m >= 32:
        bm = _round_up(_cdiv(m, 2), 16)

    grid = (_cdiv(m, bm), np_ // bn, kp // bk)

    itemsize = patches.dtype.itemsize
    est_vmem = (
        2 * (bm * bk + bk * bn) * itemsize          # double-buffered inputs
        + 2 * bm * bn * jnp.dtype(out_dtype).itemsize
        + bm * bn * 4                               # f32 accumulator
        + 2 * bn * 4                                # bias
    )
    vmem_limit = int(min(48 << 20, max(32 << 20, 2 * est_vmem)))

    return pl.pallas_call(
        _make_kernel(activation),
        out_shape=jax.ShapeDtypeStruct((m, np_), out_dtype),
        grid_spec=pltpu.PrefetchScalarGridSpec(
            num_scalar_prefetch=0,
            grid=grid,
            in_specs=[
                pl.BlockSpec((bm, bk), lambda i, j, k: (i, k)),  # patches
                pl.BlockSpec((bk, bn), lambda i, j, k: (k, j)),  # scaled W
                pl.BlockSpec((1, bn), lambda i, j, k: (0, j)),   # BN bias
            ],
            out_specs=pl.BlockSpec((bm, bn), lambda i, j, k: (i, j)),
            scratch_shapes=[pltpu.VMEM((bm, bn), jnp.float32)],
        ),
        compiler_params=pltpu.CompilerParams(
            dimension_semantics=("parallel", "parallel", "arbitrary"),
            vmem_limit_bytes=vmem_limit,
        ),
    )(patches, w_mat, bias)


# ----------------------------------------------------------------------------
# Wrapper: NHWC patches + fused pallas_call
# ----------------------------------------------------------------------------
@functools.partial(
    jax.jit,
    static_argnames=(
        "stride", "padding", "eps", "activation", "out_format", "compute_dtype"
    ),
)
def basic_conv2d(
    x,
    weight,
    gamma,
    beta,
    running_mean,
    running_var,
    *,
    stride=1,
    padding=0,
    eps=1e-5,
    activation="relu",
    out_format="NCHW",
    compute_dtype=jnp.bfloat16,
):
    """Forward pass of BasicConv2d: conv (no bias) + BN (eval fold) + act."""
    n, c, h, w = x.shape
    oc, ci, kh, kw = weight.shape
    assert ci == c, "groups != 1 not supported"

    # ---- BatchNorm fold (inference mode / running stats) ----
    scale = (gamma.astype(jnp.float32) /
             jnp.sqrt(running_var.astype(jnp.float32) + eps))
    bias = beta.astype(jnp.float32) - running_mean.astype(jnp.float32) * scale

    # ---- weights: (OC,C,KH,KW) -> (C*KH*KW, OC), BN scale folded in ----
    kdim = c * kh * kw
    w_mat = weight.astype(jnp.float32).transpose(1, 2, 3, 0).reshape(kdim, oc)
    w_mat = (w_mat * scale[None, :]).astype(compute_dtype)

    np_ = _round_up(oc, 128)  # lane-dense output channels
    w_mat = jnp.pad(w_mat, ((0, 0), (0, np_ - oc)))
    bias_p = jnp.pad(bias, (0, np_ - oc)).reshape(1, np_)

    # ---- patches (im2col) in NHWC / bf16 ----
    x_nhwc = x.astype(compute_dtype).transpose(0, 2, 3, 1)
    if kh == 1 and kw == 1 and padding == 0:
        # 1x1 conv fast path: no patch extraction at all.
        x_s = x_nhwc[:, ::stride, ::stride, :]
        oh, ow = x_s.shape[1], x_s.shape[2]
        patches = x_s.reshape(n * oh * ow, c)
    else:
        # Feature ordering is channel-major (c, kh, kw) -> matches w_mat.
        p = lax.conv_general_dilated_patches(
            x_nhwc,
            (kh, kw),
            (stride, stride),
            [(padding, padding), (padding, padding)],
            dimension_numbers=("NHWC", "HWIO", "NHWC"),
        )
        oh, ow = p.shape[1], p.shape[2]
        patches = p.reshape(n * oh * ow, kdim)

    out = _fused_matmul_bn_act(patches, w_mat, bias_p, x.dtype, activation)
    out = out[:, :oc].reshape(n, oh, ow, oc)
    if out_format == "NCHW":
        # NOTE: return out_format="NHWC" to skip this transpose when the
        # consumer can take channels-last.
        out = out.transpose(0, 3, 1, 2)
    return out


# ----------------------------------------------------------------------------
# Pure-JAX reference (f32, matches the PyTorch module in eval mode)
# ----------------------------------------------------------------------------
def basic_conv2d_ref(
    x, weight, gamma, beta, running_mean, running_var, *,
    stride, padding, eps, activation
):
    y = jax.lax.conv_general_dilated(
        x,
        weight,
        window_strides=(stride, stride),
        padding=[(padding, padding), (padding, padding)],
        dimension_numbers=("NCHW", "OIHW", "NCHW"),
        precision=jax.lax.Precision.HIGHEST,
    )
    scale = gamma / jnp.sqrt(running_var + eps)
    bias = beta - running_mean * scale
    y = y * scale[None, :, None, None] + bias[None, :, None, None]
    if activation in ("relu", "R_LeakyReLU_ReLU", "R_Mish_ReLU"):
        y = jnp.maximum(y, 0.0)
    elif activation == "LeakyReLU":
        y = jnp.where(y > 0, y, 0.01 * y)
    elif activation == "swish":
        y = y * jax.nn.sigmoid(y)
    elif activation == "mish":
        y = y * jnp.tanh(jax.nn.softplus(y))
    return y.astype(x.dtype)


# ----------------------------------------------------------------------------
# Demo / self-check
# ----------------------------------------------------------------------------
if __name__ == "__main__":
    key = jax.random.PRNGKey(0)
    k1, k2, k3, k4, k5, k6 = jax.random.split(key, 6)

    N, C, H, W = 2, 4, 16, 16
    OC, KH, KW = 8, 3, 3
    stride, padding, eps = 1, 1, 1e-5

    x = jax.random.normal(k1, (N, C, H, W), dtype=jnp.float32)
    weight = jax.random.normal(k2, (OC, C, KH, KW), dtype=jnp.float32) * 0.1
    gamma = 1.0 + 0.1 * jax.random.normal(k3, (OC,), dtype=jnp.float32)
    beta = 0.1 * jax.random.normal(k4, (OC,), dtype=jnp.float32)
    running_mean = 0.1 * jax.random.normal(k5, (OC,), dtype=jnp.float32)
    running_var = jax.random.uniform(
        k6, (OC,), dtype=jnp.float32, minval=0.5, maxval=1.5
    )

    # 3x3 conv + BN + mish (im2col path)
    y = basic_conv2d(
        x, weight, gamma, beta, running_mean, running_var,
        stride=stride, padding=padding, eps=eps, activation="mish",
    )
    y = jax.block_until_ready(y)
    y_ref = basic_conv2d_ref(
        x, weight, gamma, beta, running_mean, running_var,
        stride=stride, padding=padding, eps=eps, activation="mish",
    )
    assert y.shape == (N, OC, H, W) and y.dtype == x.dtype
    err = float(jnp.max(jnp.abs(y - y_ref)))
    assert jnp.allclose(y, y_ref, rtol=3e-2, atol=3e-2), err

    # 1x1 conv + BN + relu (no-im2col fast path)
    w1 = jax.random.normal(k2, (OC, C, 1, 1), dtype=jnp.float32) * 0.1
    y1 = basic_conv2d(
        x, w1, gamma, beta, running_mean, running_var,
        stride=1, padding=0, eps=eps, activation="relu",
    )
    y1 = jax.block_until_ready(y1)
    y1_ref = basic_conv2d_ref(
        x, w1, gamma, beta, running_mean, running_var,
        stride=1, padding=0, eps=eps, activation="relu",
    )
    assert y1.shape == (N, OC, H, W)
    assert jnp.allclose(y1, y1_ref, rtol=3e-2, atol=3e-2)

    print("KERNEL_OK")
</pallas_src>

<mosaic_0001>
module attributes {stable_mosaic.version = 11 : i64} {
  func.func @kernel(%arg0: i32, %arg1: i32, %arg2: i32, %arg3: memref<256x36xbf16, #tpu.memory_space<vmem>>, %arg4: memref<36x128xbf16, #tpu.memory_space<vmem>>, %arg5: memref<1x128xf32, #tpu.memory_space<vmem>>, %arg6: memref<256x128xf32, #tpu.memory_space<vmem>>, %arg7: memref<256x128xf32, #tpu.memory_space<vmem>>) attributes {dimension_semantics = [#tpu.dimension_semantics<parallel>, #tpu.dimension_semantics<parallel>, #tpu.dimension_semantics<arbitrary>], iteration_bounds = array<i64: 2, 1, 1>, scalar_prefetch = 0 : i64, scratch_operands = 1 : i64, tpu.core_type = #tpu.core_type<tc>, window_params = [{transform_indices = @transform_0, window_bounds = array<i64: 256, 36>}, {transform_indices = @transform_1, window_bounds = array<i64: 36, 128>}, {transform_indices = @transform_2, window_bounds = array<i64: 1, 128>}, {transform_indices = @transform_3, window_bounds = array<i64: 256, 128>}]} {
    %c0_i32 = arith.constant 0 : i32
    %0 = arith.cmpi eq, %arg2, %c0_i32 : i32
    %1 = arith.extui %0 : i1 to i32
    %c0_i32_0 = arith.constant 0 : i32
    %2 = arith.cmpi ne, %1, %c0_i32_0 : i32
    scf.if %2 {
      %cst_10 = arith.constant 0.000000e+00 : f32
      %12 = vector.broadcast %cst_10 : f32 to vector<256x128xf32>
      %c0_11 = arith.constant 0 : index
      %c0_12 = arith.constant 0 : index
      %13 = vector.load %arg7[%c0_11, %c0_12] : memref<256x128xf32, #tpu.memory_space<vmem>>, vector<256x128xf32>
      tpu.vector_store %arg7[%c0_11, %c0_12], %12 {strides = array<i32>} : memref<256x128xf32, #tpu.memory_space<vmem>>, vector<256x128xf32>,
    } else {
    }
    %c0 = arith.constant 0 : index
    %c0_1 = arith.constant 0 : index
    %3 = vector.load %arg7[%c0, %c0_1] : memref<256x128xf32, #tpu.memory_space<vmem>>, vector<256x128xf32>
    %c0_2 = arith.constant 0 : index
    %c0_3 = arith.constant 0 : index
    %4 = vector.load %arg3[%c0_2, %c0_3] : memref<256x36xbf16, #tpu.memory_space<vmem>>, vector<256x36xbf16>
    %c0_4 = arith.constant 0 : index
    %c0_5 = arith.constant 0 : index
    %5 = vector.load %arg4[%c0_4, %c0_5] : memref<36x128xbf16, #tpu.memory_space<vmem>>, vector<36x128xbf16>
    %cst = arith.constant dense<0.000000e+00> : vector<256x128xf32>
    %6 = tpu.matmul %4, %5, %cst {dimension_numbers = #tpu.dot_dimension_numbers<[1], [0], [0], [1], [0, 0, 1, 1], [], []>} : vector<256x36xbf16>, vector<36x128xbf16>, vector<256x128xf32> -> vector<256x128xf32>
    %7 = arith.addf %3, %6 : vector<256x128xf32>
    %c0_6 = arith.constant 0 : index
    %c0_7 = arith.constant 0 : index
    %8 = vector.load %arg7[%c0_6, %c0_7] : memref<256x128xf32, #tpu.memory_space<vmem>>, vector<256x128xf32>
    tpu.vector_store %arg7[%c0_6, %c0_7], %7 {strides = array<i32>} : memref<256x128xf32, #tpu.memory_space<vmem>>, vector<256x128xf32>,
    %c0_i32_8 = arith.constant 0 : i32
    %9 = arith.cmpi eq, %arg2, %c0_i32_8 : i32
    %10 = arith.extui %9 : i1 to i32
    %c0_i32_9 = arith.constant 0 : i32
    %11 = arith.cmpi ne, %10, %c0_i32_9 : i32
    scf.if %11 {
      %c0_10 = arith.constant 0 : index
      %c0_11 = arith.constant 0 : index
      %12 = vector.load %arg7[%c0_10, %c0_11] : memref<256x128xf32, #tpu.memory_space<vmem>>, vector<256x128xf32>
      %c0_12 = arith.constant 0 : index
      %c0_13 = arith.constant 0 : index
      %13 = vector.load %arg5[%c0_12, %c0_13] : memref<1x128xf32, #tpu.memory_space<vmem>>, vector<1x128xf32>
      %14 = vector.broadcast %13 : vector<1x128xf32> to vector<256x128xf32>
      %15 = arith.addf %12, %14 : vector<256x128xf32>
      %cst_14 = arith.constant 2.000000e+01 : f32
      %16 = vector.broadcast %cst_14 : f32 to vector<256x128xf32>
      %17 = arith.minimumf %15, %16 : vector<256x128xf32>
      %18 = math.exp %17 : vector<256x128xf32>
      %cst_15 = arith.constant 2.000000e+00 : f32
      %19 = vector.broadcast %cst_15 : f32 to vector<256x128xf32>
      %20 = arith.addf %18, %19 : vector<256x128xf32>
      %21 = arith.mulf %18, %20 : vector<256x128xf32>
      %cst_16 = arith.constant 2.000000e+00 : f32
      %22 = vector.broadcast %cst_16 : f32 to vector<256x128xf32>
      %23 = arith.addf %21, %22 : vector<256x128xf32>
      %24 = arith.divf %21, %23 : vector<256x128xf32>
      %25 = arith.mulf %15, %24 : vector<256x128xf32>
      %c0_17 = arith.constant 0 : index
      %c0_18 = arith.constant 0 : index
      %26 = vector.load %arg6[%c0_17, %c0_18] : memref<256x128xf32, #tpu.memory_space<vmem>>, vector<256x128xf32>
      tpu.vector_store %arg6[%c0_17, %c0_18], %25 {strides = array<i32>} : memref<256x128xf32, #tpu.memory_space<vmem>>, vector<256x128xf32>,
    } else {
    }
    return
  }
  func.func @transform_0(%arg0: i32, %arg1: i32, %arg2: i32) -> (i32, i32) {
    %c0_i32 = arith.constant 0 : i32
    return %arg0, %arg2 : i32, i32
  }
  func.func @transform_1(%arg0: i32, %arg1: i32, %arg2: i32) -> (i32, i32) {
    %c0_i32 = arith.constant 0 : i32
    return %arg2, %arg1 : i32, i32
  }
  func.func @transform_2(%arg0: i32, %arg1: i32, %arg2: i32) -> (i32, i32) {
    %c0_i32 = arith.constant 0 : i32
    %c0_i32_0 = arith.constant 0 : i32
    return %c0_i32, %arg1 : i32, i32
  }
  func.func @transform_3(%arg0: i32, %arg1: i32, %arg2: i32) -> (i32, i32) {
    %c0_i32 = arith.constant 0 : i32
    return %arg0, %arg1 : i32, i32
  }
}

</mosaic_0001>

<llo_original>
// kernel: basic_conv2d.1
$region0: #{basic_conv2d.1}
  #allocation0 [shape = 'u32[]', space=smem, size = 0x4, offset = 0x4, fixed_abs, tag = 'smem constant byte address 0x4 - core index']
  #allocation1 [shape = 'u32[144,128]{1,0:T(1,128)}', space=vmem, size = 0x12000, scoped, tag = 'internal scratch']
  #allocation2 [shape = 'f32[256,128]{1,0:T(8,128)}', space=vmem, size = 0x20000, scoped, tag = 'scratch operand']
  %s0 = inlined_call_operand.vmem [shape: bf16[512,36], index: 0, kind: input, shape index: {}]
  %s1 = inlined_call_operand.vmem [shape: bf16[36,128], index: 1, kind: input, shape index: {}]
  %s2 = inlined_call_operand.vmem [shape: f32[1,128], index: 2, kind: input, shape index: {}]
  %s3 = inlined_call_operand.vmem [shape: f32[512,128], index: 3, kind: output, shape index: {}]
  %s4 = sld [smem:[#allocation0]]
  $region53: #{basic_conv2d.1} parent=0
    _
  %s6 = ssub.s32 1, %s4
  %s7 = scalar_select 0, %s6, %s4
  loop: start=0, step=1, limit=4
  $region2: #{basic_conv2d.1} parent=0 // loop_pre_header
    _
  $region3: #{basic_conv2d.1} parent=0 // loop_header
    %s9 = sphi 0, %s13
    %p10 = scmp.ge.s32.totalorder %s9, 4
    %s16 = sphi 0, %s35
    %s17 = sphi 0, %s31
    %s18 = sphi 0, %s27
    %s19 = sphi 0, %s16
    %s20 = sphi 0, %s17
    %s21 = sphi 0, %s18
    %s22 = sphi 0, %s19
    %s23 = sphi 0, %s20
    %s24 = sphi 0, %s21
    %s40 = sphi 0, %s42
    %s43 = sphi 0, %s40
    %s44 = sphi 0, %s43
    %s60 = sphi 0, %s44
    %s68 = sphi 0, %s70
    %s71 = sphi 0, %s68
    %s72 = sphi 0, %s71
    %s88 = sphi 0, %s72
    %s94 = sphi 0, %s96
    %s97 = sphi 0, %s94
    %s98 = sphi 0, %s97
    %s114 = sphi 0, %s98
    %s122 = sphi 0, %s124
    %s125 = sphi 0, %s122
    %s126 = sphi 0, %s125
    %s142 = sphi 0, %s126
  $region4: #{basic_conv2d.1} parent=0 // loop_header_branch
    %12 = sbr.rel (%p10) target = $region8
  $region5: #{basic_conv2d.1} parent=0 // loop_body
    %s14 = ssub.s32 %s9, 1
    %s15 = ssub.s32 %s9, 2
    %s25 = sadd.s32 1, %s18
    %p26 = scmp.ge.s32.totalorder %s25, 1
    %s27 = scalar_select %p26, 0, %s25
    %s28 = sadd.s32 1, %s17
    %s29 = scalar_select %p26, %s28, %s17
    %p30 = scmp.ge.s32.totalorder %s29, 1
    %s31 = scalar_select %p30, 0, %s29
    %s32 = sadd.s32 1, %s16
    %s33 = scalar_select %p30, %s32, %s16
    %p34 = scmp.ge.s32.totalorder %s33, 2
    %s35 = scalar_select %p34, 0, %s33
    %s36 = ssub.s32 %s16, %s35
    %s37 = ssub.s32 %s18, %s27
    %s38 = sor.u32 %s36, %s37
    %p39 = scmp.eq.s32.totalorder %s38, 0
    %s41 = sadd.s32 %s40, 1
    %s42 = scalar_select %p39, %s40, %s41
    %p45 = pneg %p39
    %p46 = scmp.eq.s32.totalorder %s9, 1
    %p47 = por %p45, %p46
    %p48 = scmp.ne.s32.totalorder %s40, %s43
    %p49 = scmp.eq.s32.totalorder %s9, 0
    %p50 = por %p48, %p49
    %p51 = scmp.ne.s32.totalorder %s40, %s43
    %p52 = scmp.eq.s32.totalorder %s14, 1
    %p53 = por %p51, %p52
    %p54 = scmp.ne.s32.totalorder %s43, %s44
    %p55 = scmp.eq.s32.totalorder %s14, 0
    %p56 = por %p54, %p55
    %p57 = scmp.ne.s32.totalorder %s43, %s44
    %p58 = scmp.eq.s32.totalorder %s15, 1
    %p59 = por %p57, %p58
    %p61 = scmp.ne.s32.totalorder %s44, %s60
    %p62 = scmp.eq.s32.totalorder %s15, 0
    %p63 = por %p61, %p62
    %s64 = ssub.s32 %s18, %s27
    %s65 = ssub.s32 %s17, %s31
    %s66 = sor.u32 %s64, %s65
    %p67 = scmp.eq.s32.totalorder %s66, 0
    %s69 = sadd.s32 %s68, 1
    %s70 = scalar_select %p67, %s68, %s69
    %p73 = pneg %p67
    %p74 = scmp.eq.s32.totalorder %s9, 1
    %p75 = por %p73, %p74
    %p76 = scmp.ne.s32.totalorder %s68, %s71
    %p77 = scmp.eq.s32.totalorder %s9, 0
    %p78 = por %p76, %p77
    %p79 = scmp.ne.s32.totalorder %s68, %s71
    %p80 = scmp.eq.s32.totalorder %s14, 1
    %p81 = por %p79, %p80
    %p82 = scmp.ne.s32.totalorder %s71, %s72
    %p83 = scmp.eq.s32.totalorder %s14, 0
    %p84 = por %p82, %p83
    %p85 = scmp.ne.s32.totalorder %s71, %s72
    %p86 = scmp.eq.s32.totalorder %s15, 1
    %p87 = por %p85, %p86
    %p89 = scmp.ne.s32.totalorder %s72, %s88
    %p90 = scmp.eq.s32.totalorder %s15, 0
    %p91 = por %p89, %p90
    %s92 = ssub.s32 %s17, %s31
    %p93 = scmp.eq.s32.totalorder %s92, 0
    %s95 = sadd.s32 %s94, 1
    %s96 = scalar_select %p93, %s94, %s95
    %p99 = pneg %p93
    %p100 = scmp.eq.s32.totalorder %s9, 1
    %p101 = por %p99, %p100
    %p102 = scmp.ne.s32.totalorder %s94, %s97
    %p103 = scmp.eq.s32.totalorder %s9, 0
    %p104 = por %p102, %p103
    %p105 = scmp.ne.s32.totalorder %s94, %s97
    %p106 = scmp.eq.s32.totalorder %s14, 1
    %p107 = por %p105, %p106
    %p108 = scmp.ne.s32.totalorder %s97, %s98
    %p109 = scmp.eq.s32.totalorder %s14, 0
    %p110 = por %p108, %p109
    %p111 = scmp.ne.s32.totalorder %s97, %s98
    %p112 = scmp.eq.s32.totalorder %s15, 1
    %p113 = por %p111, %p112
    %p115 = scmp.ne.s32.totalorder %s98, %s114
    %p116 = scmp.eq.s32.totalorder %s15, 0
    %p117 = por %p115, %p116
    %s118 = ssub.s32 %s16, %s35
    %s119 = ssub.s32 %s17, %s31
    %s120 = sor.u32 %s118, %s119
    %p121 = scmp.eq.s32.totalorder %s120, 0
    %s123 = sadd.s32 %s122, 1
    %s124 = scalar_select %p121, %s122, %s123
    %p127 = pneg %p121
    %p128 = scmp.eq.s32.totalorder %s9, 1
    %p129 = por %p127, %p128
    %p130 = scmp.ne.s32.totalorder %s122, %s125
    %p131 = scmp.eq.s32.totalorder %s9, 0
    %p132 = por %p130, %p131
    %p133 = scmp.ne.s32.totalorder %s122, %s125
    %p134 = scmp.eq.s32.totalorder %s14, 1
    %p135 = por %p133, %p134
    %p136 = scmp.ne.s32.totalorder %s125, %s126
    %p137 = scmp.eq.s32.totalorder %s14, 0
    %p138 = por %p136, %p137
    %p139 = scmp.ne.s32.totalorder %s125, %s126
    %p140 = scmp.eq.s32.totalorder %s15, 1
    %p141 = por %p139, %p140
    %p143 = scmp.ne.s32.totalorder %s126, %s142
    %p144 = scmp.eq.s32.totalorder %s15, 0
    %p145 = por %p143, %p144
    %p146 = scmp.le.s32.totalorder 1, %s9
    %p147 = scmp.lt.s32.totalorder %s9, 3
    %p148 = pnand %p146, %p147
    %p149 = pneg %p148
    // Predicated region
    $region9: #{basic_conv2d.1} parent=5 // pred_check
      _
    $region10: #{basic_conv2d.1} parent=5 // pred_check_branch
      %151 = sbr.rel (%p148) target = $region12
    $region11: #{basic_conv2d.1} parent=5 // pred_region
      %s152 = ssub.s32 %s9, 1
      // Predicated region
      $region13: #{basic_conv2d.1} parent=11 // pred_check
        %p153 = pneg %p84
      $region14: #{basic_conv2d.1} parent=11 // pred_check_branch
        %155 = sbr.rel (%p153) target = $region16
      $region15: #{basic_conv2d.1} parent=11 // pred_region
        %s156 = smul.u32 5, %s21
        %p157 = scmp.lt.s32.totalorder %s156, 4
        %s158 = scalar_select %p157, %s156, 4
        %p159 = scmp.lt.s32.totalorder %s20, 0
        %s160 = scalar_select %p159, %s20, 0
        %s161 = sadd.s32 %s160, %s158
        %s162 = smul.addr %s161, 4
        %s163 = scalar_lea.vmem %s1, %s162
        %s164 = smul.u32 5, %s21
      $region16: #{basic_conv2d.1} parent=11 // pred_fallthru
        _
      // Predicated region
      $region17: #{basic_conv2d.1} parent=11 // pred_check
        %p165 = pneg %p110
      $region18: #{basic_conv2d.1} parent=11 // pred_check_branch
        %167 = sbr.rel (%p165) target = $region20
      $region19: #{basic_conv2d.1} parent=11 // pred_region
        %p168 = scmp.lt.s32.totalorder %s20, 0
        %s169 = scalar_select %p168, %s20, 0
        %s170 = scalar_lea.vmem %s2, %s169
      $region20: #{basic_conv2d.1} parent=11 // pred_fallthru
        _
    $region12: #{basic_conv2d.1} parent=5 // pred_fallthru
      _
    %p171 = scmp.lt.s32.totalorder %s9, 2
    // Predicated region
    $region21: #{basic_conv2d.1} parent=5 // pred_check
      %p172 = pneg %p171
    $region22: #{basic_conv2d.1} parent=5 // pred_check_branch
      %174 = sbr.rel (%p172) target = $region24
    $region23: #{basic_conv2d.1} parent=5 // pred_region
      // Predicated region
      $region25: #{basic_conv2d.1} parent=23 // pred_check
        %p175 = pneg %p50
      $region26: #{basic_conv2d.1} parent=23 // pred_check_branch
        %177 = sbr.rel (%p175) target = $region28
      $region27: #{basic_conv2d.1} parent=23 // pred_region
        %s178 = smul.u32 32, %s16
        %p179 = scmp.lt.s32.totalorder %s178, 63
        %s180 = scalar_select %p179, %s178, 63
        %p181 = scmp.lt.s32.totalorder %s18, 0
        %s182 = scalar_select %p181, %s18, 0
        %s183 = sadd.s32 %s182, %s180
        %s184 = smul.addr %s183, 4
        %s185 = scalar_lea.vmem %s0, %s184
        %s186 = smul.u32 32, %s16
      $region28: #{basic_conv2d.1} parent=23 // pred_fallthru
        _
    $region24: #{basic_conv2d.1} parent=5 // pred_fallthru
      _
    %p187 = scmp.le.s32.totalorder 1, %s9
    %p188 = scmp.lt.s32.totalorder %s9, 3
    %p189 = pnand %p187, %p188
    %p190 = pneg %p189
    // Predicated region
    $region29: #{basic_conv2d.1} parent=5 // pred_check
      _
    $region30: #{basic_conv2d.1} parent=5 // pred_check_branch
      %192 = sbr.rel (%p189) target = $region32
    $region31: #{basic_conv2d.1} parent=5 // pred_region
      %s193 = ssub.s32 %s9, 1
      %s194 = smul.u32 32, %s19
      %p195 = scmp.lt.s32.totalorder %s194, 63
      %s196 = scalar_select %p195, %s194, 63
      %p197 = scmp.lt.s32.totalorder %s21, 0
      %s198 = scalar_select %p197, %s21, 0
      %s199 = sadd.s32 %s198, %s196
      %s200 = smul.addr %s199, 4
      %s201 = scalar_lea.vmem %s0, %s200
      %p202 = pneg %p56
      %p203 = pneg %p53
      %s204 = smul.u32 5, %s21
      %p205 = scmp.lt.s32.totalorder %s204, 4
      %s206 = scalar_select %p205, %s204, 4
      %p207 = scmp.lt.s32.totalorder %s20, 0
      %s208 = scalar_select %p207, %s20, 0
      %s209 = sadd.s32 %s208, %s206
      %s210 = smul.addr %s209, 4
      %s211 = scalar_lea.vmem %s1, %s210
      %p212 = pneg %p84
      %p213 = pneg %p81
      %p214 = scmp.lt.s32.totalorder %s20, 0
      %s215 = scalar_select %p214, %s20, 0
      %s216 = scalar_lea.vmem %s2, %s215
      %p217 = pneg %p110
      %p218 = pneg %p107
      %p219 = pneg %p138
      %p220 = pneg %p135
      %s221 = smul.u32 32, %s19
      %p222 = scmp.lt.s32.totalorder %s221, 63
      %s223 = scalar_select %p222, %s221, 63
      %p224 = scmp.lt.s32.totalorder %s20, 0
      %s225 = scalar_select %p224, %s20, 0
      %s226 = sadd.s32 %s225, %s223
      %s227 = smul.addr %s226, 8
      %s228 = scalar_lea.vmem %s3, %s227
      %s229 = smul.u32 32, %s19
      %p230 = scmp.lt.s32.totalorder %s229, 63
      %s231 = scalar_select %p230, %s229, 63
      %p232 = scmp.lt.s32.totalorder %s21, 0
      %s233 = scalar_select %p232, %s21, 0
      %s234 = sadd.s32 %s233, %s231
      %s235 = smul.addr %s234, 4
      %s236 = scalar_lea.vmem %s0, %s235
      %s237 = smul.u32 32, %s19
      %s238 = smul.u32 5, %s21
      %p239 = scmp.lt.s32.totalorder %s238, 4
      %s240 = scalar_select %p239, %s238, 4
      %p241 = scmp.lt.s32.totalorder %s20, 0
      %s242 = scalar_select %p241, %s20, 0
      %s243 = sadd.s32 %s242, %s240
      %s244 = smul.addr %s243, 4
      %s245 = scalar_lea.vmem %s1, %s244
      %s246 = smul.u32 5, %s21
      %p247 = scmp.lt.s32.totalorder %s20, 0
      %s248 = scalar_select %p247, %s20, 0
      %s249 = scalar_lea.vmem %s2, %s248
      %s250 = smul.u32 32, %s19
      %p251 = scmp.lt.s32.totalorder %s250, 63
      %s252 = scalar_select %p251, %s250, 63
      %p253 = scmp.lt.s32.totalorder %s20, 0
      %s254 = scalar_select %p253, %s20, 0
      %s255 = sadd.s32 %s254, %s252
      %s256 = smul.addr %s255, 8
      %s257 = scalar_lea.vmem %s3, %s256
      %s258 = smul.u32 32, %s19
      %p260 = scmp.eq.s32.totalorder %s21, 0
      // Predicated region
      $region33: #{basic_conv2d.1} parent=31 // pred_check
        %p261 = pneg %p260
      $region34: #{basic_conv2d.1} parent=31 // pred_check_branch
        %263 = sbr.rel (%p261) target = $region36
      $region35: #{basic_conv2d.1} parent=31 // pred_region
        %264 = vst [vmem:[#allocation2] sm:$0xff] 0.0
        %265 = vst [vmem:[#allocation2 + $0x8] sm:$0xff] 0.0
        %266 = vst [vmem:[#allocation2 + $0x10] sm:$0xff] 0.0
        %267 = vst [vmem:[#allocation2 + $0x18] sm:$0xff] 0.0
        %268 = vst [vmem:[#allocation2 + $0x20] sm:$0xff] 0.0
        %269 = vst [vmem:[#allocation2 + $0x28] sm:$0xff] 0.0
        %270 = vst [vmem:[#allocation2 + $0x30] sm:$0xff] 0.0
        %271 = vst [vmem:[#allocation2 + $0x38] sm:$0xff] 0.0
        %272 = vst [vmem:[#allocation2 + $0x40] sm:$0xff] 0.0
        %273 = vst [vmem:[#allocation2 + $0x48] sm:$0xff] 0.0
        %274 = vst [vmem:[#allocation2 + $0x50] sm:$0xff] 0.0
        %275 = vst [vmem:[#allocation2 + $0x58] sm:$0xff] 0.0
        %276 = vst [vmem:[#allocation2 + $0x60] sm:$0xff] 0.0
        %277 = vst [vmem:[#allocation2 + $0x68] sm:$0xff] 0.0
        %278 = vst [vmem:[#allocation2 + $0x70] sm:$0xff] 0.0
        %279 = vst [vmem:[#allocation2 + $0x78] sm:$0xff] 0.0
        %280 = vst [vmem:[#allocation2 + $0x80] sm:$0xff] 0.0
        %281 = vst [vmem:[#allocation2 + $0x88] sm:$0xff] 0.0
        %282 = vst [vmem:[#allocation2 + $0x90] sm:$0xff] 0.0
        %283 = vst [vmem:[#allocation2 + $0x98] sm:$0xff] 0.0
        %284 = vst [vmem:[#allocation2 + $0xa0] sm:$0xff] 0.0
        %285 = vst [vmem:[#allocation2 + $0xa8] sm:$0xff] 0.0
        %286 = vst [vmem:[#allocation2 + $0xb0] sm:$0xff] 0.0
        %287 = vst [vmem:[#allocation2 + $0xb8] sm:$0xff] 0.0
        %288 = vst [vmem:[#allocation2 + $0xc0] sm:$0xff] 0.0
        %289 = vst [vmem:[#allocation2 + $0xc8] sm:$0xff] 0.0
        %290 = vst [vmem:[#allocation2 + $0xd0] sm:$0xff] 0.0
        %291 = vst [vmem:[#allocation2 + $0xd8] sm:$0xff] 0.0
        %292 = vst [vmem:[#allocation2 + $0xe0] sm:$0xff] 0.0
        %293 = vst [vmem:[#allocation2 + $0xe8] sm:$0xff] 0.0
        %294 = vst [vmem:[#allocation2 + $0xf0] sm:$0xff] 0.0
        %295 = vst [vmem:[#allocation2 + $0xf8] sm:$0xff] 0.0
      $region36: #{basic_conv2d.1} parent=31 // pred_fallthru
        _
      %v296 = vld [vmem:[#allocation2] sm:$0xff]
      %v297 = vld [vmem:[#allocation2 + $0x8] sm:$0xff]
      %v298 = vld [vmem:[#allocation2 + $0x10] sm:$0xff]
      %v299 = vld [vmem:[#allocation2 + $0x18] sm:$0xff]
      %v300 = vld [vmem:[#allocation2 + $0x20] sm:$0xff]
      %v301 = vld [vmem:[#allocation2 + $0x28] sm:$0xff]
      %v302 = vld [vmem:[#allocation2 + $0x30] sm:$0xff]
      %v303 = vld [vmem:[#allocation2 + $0x38] sm:$0xff]
      %v304 = vld [vmem:[#allocation2 + $0x40] sm:$0xff]
      %v305 = vld [vmem:[#allocation2 + $0x48] sm:$0xff]
      %v306 = vld [vmem:[#allocation2 + $0x50] sm:$0xff]
      %v307 = vld [vmem:[#allocation2 + $0x58] sm:$0xff]
      %v308 = vld [vmem:[#allocation2 + $0x60] sm:$0xff]
      %v309 = vld [vmem:[#allocation2 + $0x68] sm:$0xff]
      %v310 = vld [vmem:[#allocation2 + $0x70] sm:$0xff]
      %v311 = vld [vmem:[#allocation2 + $0x78] sm:$0xff]
      %v312 = vld [vmem:[#allocation2 + $0x80] sm:$0xff]
      %v313 = vld [vmem:[#allocation2 + $0x88] sm:$0xff]
      %v314 = vld [vmem:[#allocation2 + $0x90] sm:$0xff]
      %v315 = vld [vmem:[#allocation2 + $0x98] sm:$0xff]
      %v316 = vld [vmem:[#allocation2 + $0xa0] sm:$0xff]
      %v317 = vld [vmem:[#allocation2 + $0xa8] sm:$0xff]
      %v318 = vld [vmem:[#allocation2 + $0xb0] sm:$0xff]
      %v319 = vld [vmem:[#allocation2 + $0xb8] sm:$0xff]
      %v320 = vld [vmem:[#allocation2 + $0xc0] sm:$0xff]
      %v321 = vld [vmem:[#allocation2 + $0xc8] sm:$0xff]
      %v322 = vld [vmem:[#allocation2 + $0xd0] sm:$0xff]
      %v323 = vld [vmem:[#allocation2 + $0xd8] sm:$0xff]
      %v324 = vld [vmem:[#allocation2 + $0xe0] sm:$0xff]
      %v325 = vld [vmem:[#allocation2 + $0xe8] sm:$0xff]
      %v326 = vld [vmem:[#allocation2 + $0xf0] sm:$0xff]
      %v327 = vld [vmem:[#allocation2 + $0xf8] sm:$0xff]
      %v328 = vld [vmem:[%s236] sm:$0xf]
      %v329 = vld [vmem:[%s236 + $0x4] sm:$0xf]
      %v330 = vld [vmem:[%s236 + $0x8] sm:$0xf]
      %v331 = vld [vmem:[%s236 + $0xc] sm:$0xf]
      %v332 = vld [vmem:[%s236 + $0x10] sm:$0xf]
      %v333 = vld [vmem:[%s236 + $0x14] sm:$0xf]
      %v334 = vld [vmem:[%s236 + $0x18] sm:$0xf]
      %v335 = vld [vmem:[%s236 + $0x1c] sm:$0xf]
      %v336 = vld [vmem:[%s236 + $0x20] sm:$0xf]
      %v337 = vld [vmem:[%s236 + $0x24] sm:$0xf]
      %v338 = vld [vmem:[%s236 + $0x28] sm:$0xf]
      %v339 = vld [vmem:[%s236 + $0x2c] sm:$0xf]
      %v340 = vld [vmem:[%s236 + $0x30] sm:$0xf]
      %v341 = vld [vmem:[%s236 + $0x34] sm:$0xf]
      %v342 = vld [vmem:[%s236 + $0x38] sm:$0xf]
      %v343 = vld [vmem:[%s236 + $0x3c] sm:$0xf]
      %v344 = vld [vmem:[%s236 + $0x40] sm:$0xf]
      %v345 = vld [vmem:[%s236 + $0x44] sm:$0xf]
      %v346 = vld [vmem:[%s236 + $0x48] sm:$0xf]
      %v347 = vld [vmem:[%s236 + $0x4c] sm:$0xf]
      %v348 = vld [vmem:[%s236 + $0x50] sm:$0xf]
      %v349 = vld [vmem:[%s236 + $0x54] sm:$0xf]
      %v350 = vld [vmem:[%s236 + $0x58] sm:$0xf]
      %v351 = vld [vmem:[%s236 + $0x5c] sm:$0xf]
      %v352 = vld [vmem:[%s236 + $0x60] sm:$0xf]
      %v353 = vld [vmem:[%s236 + $0x64] sm:$0xf]
      %v354 = vld [vmem:[%s236 + $0x68] sm:$0xf]
      %v355 = vld [vmem:[%s236 + $0x6c] sm:$0xf]
      %v356 = vld [vmem:[%s236 + $0x70] sm:$0xf]
      %v357 = vld [vmem:[%s236 + $0x74] sm:$0xf]
      %v358 = vld [vmem:[%s236 + $0x78] sm:$0xf]
      %v359 = vld [vmem:[%s236 + $0x7c] sm:$0xf]
      %v360 = vld [vmem:[%s245] sm:$0xf]
      %v361 = vld [vmem:[%s245 + $0x4] sm:$0xf]
      %v362 = vld [vmem:[%s245 + $0x8] sm:$0xf]
      %v363 = vld [vmem:[%s245 + $0xc] sm:$0xf]
      %v364 = vld [vmem:[%s245 + $0x10] sm:$0x3]
      %v397 = vunpack.c.l.b16 %v328
      %v398 = vunpack.c.l.b16 %v329
      %v399 = vunpack.c.l.b16 %v330
      %v400 = vunpack.c.l.b16 %v331
      %v401 = vunpack.c.l.b16 %v332
      %v402 = vunpack.c.l.b16 %v333
      %v403 = vunpack.c.l.b16 %v334
      %v404 = vunpack.c.l.b16 %v335
      %v405 = vunpack.c.l.b16 %v336
      %v406 = vunpack.c.l.b16 %v337
      %v407 = vunpack.c.l.b16 %v338
      %v408 = vunpack.c.l.b16 %v339
      %v409 = vunpack.c.l.b16 %v340
      %v410 = vunpack.c.l.b16 %v341
      %v411 = vunpack.c.l.b16 %v342
      %v412 = vunpack.c.l.b16 %v343
      %v413 = vunpack.c.l.b16 %v344
      %v414 = vunpack.c.l.b16 %v345
      %v415 = vunpack.c.l.b16 %v346
      %v416 = vunpack.c.l.b16 %v347
      %v417 = vunpack.c.l.b16 %v348
      %v418 = vunpack.c.l.b16 %v349
      %v419 = vunpack.c.l.b16 %v350
      %v420 = vunpack.c.l.b16 %v351
      %v421 = vunpack.c.l.b16 %v352
      %v422 = vunpack.c.l.b16 %v353
      %v423 = vunpack.c.l.b16 %v354
      %v424 = vunpack.c.l.b16 %v355
      %v425 = vunpack.c.l.b16 %v356
      %v426 = vunpack.c.l.b16 %v357
      %v427 = vunpack.c.l.b16 %v358
      %v428 = vunpack.c.l.b16 %v359
      %v429 = vpack.c.b16 %v398, %v397
      %v430 = vpack.c.b16 %v400, %v399
      %v431 = vpack.c.b16 %v402, %v401
      %v432 = vpack.c.b16 %v404, %v403
      %v433 = vpack.c.b16 %v406, %v405
      %v434 = vpack.c.b16 %v408, %v407
      %v435 = vpack.c.b16 %v410, %v409
      %v436 = vpack.c.b16 %v412, %v411
      %v437 = vpack.c.b16 %v414, %v413
      %v438 = vpack.c.b16 %v416, %v415
      %v439 = vpack.c.b16 %v418, %v417
      %v440 = vpack.c.b16 %v420, %v419
      %v441 = vpack.c.b16 %v422, %v421
      %v442 = vpack.c.b16 %v424, %v423
      %v443 = vpack.c.b16 %v426, %v425
      %v444 = vpack.c.b16 %v428, %v427
      %v450 = vunpack.c.l.b16 %v360
      %v451 = vunpack.c.l.b16 %v361
      %v452 = vunpack.c.l.b16 %v362
      %v453 = vunpack.c.l.b16 %v363
      %v454 = vunpack.c.l.b16 %v364
      %v455 = vpack.c.b16 %v451, %v450
      %v456 = vpack.c.b16 %v453, %v452
      %v457 = vpack.c.b16 %v454, %v454
      %vm460 = vcmask 293888
      %v462 = vsel %vm460, %v429, 0
      %v465 = vsel %vm460, %v430, 0
      %v468 = vsel %vm460, %v431, 0
      %v471 = vsel %vm460, %v432, 0
      %v474 = vsel %vm460, %v433, 0
      %v477 = vsel %vm460, %v434, 0
      %v480 = vsel %vm460, %v435, 0
      %v483 = vsel %vm460, %v436, 0
      %v486 = vsel %vm460, %v437, 0
      %v489 = vsel %vm460, %v438, 0
      %v492 = vsel %vm460, %v439, 0
      %v495 = vsel %vm460, %v440, 0
      %v498 = vsel %vm460, %v441, 0
      %v501 = vsel %vm460, %v442, 0
      %v504 = vsel %vm460, %v443, 0
      %v507 = vsel %vm460, %v444, 0
      %vm509 = vcmask 1041408
      %v511 = vsel %vm509, %v457, 0
      %513 = vmatprep.subr.bf16.mxu0 0
      %514 = vmatpush1.bf16.msra.mxu0 %v455
      %515 = vmatprep.subr.bf16.mxu0 0
      %516 = vmatpush1.bf16.msra.mxu0 %v456
      %517 = vmatprep.subr.bf16.mxu0 0
      %518 = vmatpush1.bf16.msra.mxu0 %v511
      %519 = vmatprep.subr.bf16.mxu0 0
      %520 = vmatpush1.bf16.msra.mxu0 0
      %521 = vmatprep.subr.bf16.mxu0 0
      %522 = vmatpush1.bf16.msra.mxu0 0
      %523 = vmatprep.subr.bf16.mxu0 0
      %524 = vmatpush1.bf16.msra.mxu0 0
      %525 = vmatprep.subr.bf16.mxu0 0
      %526 = vmatpush1.bf16.msra.mxu0 0
      %527 = vmatprep.subr.bf16.mxu0 0
      %528 = vmatpush1.bf16.msra.mxu0 0
      %529 = vmatprep.subr.bf16.mxu0 0
      %530 = vmatpush1.bf16.msra.mxu0 0
      %531 = vmatprep.subr.bf16.mxu0 0
      %532 = vmatpush1.bf16.msra.mxu0 0
      %533 = vmatprep.subr.bf16.mxu0 0
      %534 = vmatpush1.bf16.msra.mxu0 0
      %535 = vmatprep.subr.bf16.mxu0 0
      %536 = vmatpush1.bf16.msra.mxu0 0
      %537 = vmatprep.subr.bf16.mxu0 0
      %538 = vmatpush1.bf16.msra.mxu0 0
      %539 = vmatprep.subr.bf16.mxu0 0
      %540 = vmatpush1.bf16.msra.mxu0 0
      %541 = vmatprep.subr.bf16.mxu0 0
      %542 = vmatpush1.bf16.msra.mxu0 0
      %543 = vmatprep.subr.bf16.mxu0 0
      %544 = vmatpush1.bf16.msra.mxu0 0
      %545 = vmatprep.mubr.bf16.mxu0 0
      %546 = vmatmul.mubr.bf16.gmra.mrb[0].mxu0 %v462
      %v547 = vpop.f32.mrb[0].mxu0
      %v548 = vadd.f32 0.0, %v547
      %v549 = vpop.f32.mrb[0].mxu0
      %v550 = vpop.f32.mrb[0].mxu0
      %v551 = vadd.f32 0.0, %v550
      %v552 = vpop.f32.mrb[0].mxu0
      %553 = vmatprep.mubr.bf16.mxu0 0
      %554 = vmatmul.mubr.bf16.gmra.mrb[0].mxu0 %v465
      %v555 = vpop.f32.mrb[0].mxu0
      %v556 = vadd.f32 0.0, %v555
      %v557 = vpop.f32.mrb[0].mxu0
      %v558 = vpop.f32.mrb[0].mxu0
      %v559 = vadd.f32 0.0, %v558
      %v560 = vpop.f32.mrb[0].mxu0
      %561 = vmatprep.mubr.bf16.mxu0 0
      %562 = vmatmul.mubr.bf16.gmra.mrb[0].mxu0 %v468
      %v563 = vpop.f32.mrb[0].mxu0
      %v564 = vadd.f32 0.0, %v563
      %v565 = vpop.f32.mrb[0].mxu0
      %v566 = vpop.f32.mrb[0].mxu0
      %v567 = vadd.f32 0.0, %v566
      %v568 = vpop.f32.mrb[0].mxu0
      %569 = vmatprep.mubr.bf16.mxu0 0
      %570 = vmatmul.mubr.bf16.gmra.mrb[0].mxu0 %v471
      %v571 = vpop.f32.mrb[0].mxu0
      %v572 = vadd.f32 0.0, %v571
      %v573 = vpop.f32.mrb[0].mxu0
      %v574 = vpop.f32.mrb[0].mxu0
      %v575 = vadd.f32 0.0, %v574
      %v576 = vpop.f32.mrb[0].mxu0
      %577 = vmatprep.mubr.bf16.mxu0 0
      %578 = vmatmul.mubr.bf16.gmra.mrb[0].mxu0 %v474
      %v579 = vpop.f32.mrb[0].mxu0
      %v580 = vadd.f32 0.0, %v579
      %v581 = vpop.f32.mrb[0].mxu0
      %v582 = vpop.f32.mrb[0].mxu0
      %v583 = vadd.f32 0.0, %v582
      %v584 = vpop.f32.mrb[0].mxu0
      %585 = vmatprep.mubr.bf16.mxu0 0
      %586 = vmatmul.mubr.bf16.gmra.mrb[0].mxu0 %v477
      %v587 = vpop.f32.mrb[0].mxu0
      %v588 = vadd.f32 0.0, %v587
      %v589 = vpop.f32.mrb[0].mxu0
      %v590 = vpop.f32.mrb[0].mxu0
      %v591 = vadd.f32 0.0, %v590
      %v592 = vpop.f32.mrb[0].mxu0
      %593 = vmatprep.mubr.bf16.mxu0 0
      %594 = vmatmul.mubr.bf16.gmra.mrb[0].mxu0 %v480
      %v595 = vpop.f32.mrb[0].mxu0
      %v596 = vadd.f32 0.0, %v595
      %v597 = vpop.f32.mrb[0].mxu0
      %v598 = vpop.f32.mrb[0].mxu0
      %v599 = vadd.f32 0.0, %v598
      %v600 = vpop.f32.mrb[0].mxu0
      %601 = vmatprep.mubr.bf16.mxu0 0
      %602 = vmatmul.mubr.bf16.gmra.mrb[0].mxu0 %v483
      %v603 = vpop.f32.mrb[0].mxu0
      %v604 = vadd.f32 0.0, %v603
      %v605 = vpop.f32.mrb[0].mxu0
      %v606 = vpop.f32.mrb[0].mxu0
      %v607 = vadd.f32 0.0, %v606
      %v608 = vpop.f32.mrb[0].mxu0
      %609 = vmatprep.mubr.bf16.mxu0 0
      %610 = vmatmul.mubr.bf16.gmra.mrb[0].mxu0 %v486
      %v611 = vpop.f32.mrb[0].mxu0
      %v612 = vadd.f32 0.0, %v611
      %v613 = vpop.f32.mrb[0].mxu0
      %v614 = vpop.f32.mrb[0].mxu0
      %v615 = vadd.f32 0.0, %v614
      %v616 = vpop.f32.mrb[0].mxu0
      %617 = vmatprep.mubr.bf16.mxu0 0
      %618 = vmatmul.mubr.bf16.gmra.mrb[0].mxu0 %v489
      %v619 = vpop.f32.mrb[0].mxu0
      %v620 = vadd.f32 0.0, %v619
      %v621 = vpop.f32.mrb[0].mxu0
      %v622 = vpop.f32.mrb[0].mxu0
      %v623 = vadd.f32 0.0, %v622
      %v624 = vpop.f32.mrb[0].mxu0
      %625 = vmatprep.mubr.bf16.mxu0 0
      %626 = vmatmul.mubr.bf16.gmra.mrb[0].mxu0 %v492
      %v627 = vpop.f32.mrb[0].mxu0
      %v628 = vadd.f32 0.0, %v627
      %v629 = vpop.f32.mrb[0].mxu0
      %v630 = vpop.f32.mrb[0].mxu0
      %v631 = vadd.f32 0.0, %v630
      %v632 = vpop.f32.mrb[0].mxu0
      %633 = vmatprep.mubr.bf16.mxu0 0
      %634 = vmatmul.mubr.bf16.gmra.mrb[0].mxu0 %v495
      %v635 = vpop.f32.mrb[0].mxu0
      %v636 = vadd.f32 0.0, %v635
      %v637 = vpop.f32.mrb[0].mxu0
      %v638 = vpop.f32.mrb[0].mxu0
      %v639 = vadd.f32 0.0, %v638
      %v640 = vpop.f32.mrb[0].mxu0
      %641 = vmatprep.mubr.bf16.mxu0 0
      %642 = vmatmul.mubr.bf16.gmra.mrb[0].mxu0 %v498
      %v643 = vpop.f32.mrb[0].mxu0
      %v644 = vadd.f32 0.0, %v643
      %v645 = vpop.f32.mrb[0].mxu0
      %v646 = vpop.f32.mrb[0].mxu0
      %v647 = vadd.f32 0.0, %v646
      %v648 = vpop.f32.mrb[0].mxu0
      %649 = vmatprep.mubr.bf16.mxu0 0
      %650 = vmatmul.mubr.bf16.gmra.mrb[0].mxu0 %v501
      %v651 = vpop.f32.mrb[0].mxu0
      %v652 = vadd.f32 0.0, %v651
      %v653 = vpop.f32.mrb[0].mxu0
      %v654 = vpop.f32.mrb[0].mxu0
      %v655 = vadd.f32 0.0, %v654
      %v656 = vpop.f32.mrb[0].mxu0
      %657 = vmatprep.mubr.bf16.mxu0 0
      %658 = vmatmul.mubr.bf16.gmra.mrb[0].mxu0 %v504
      %v659 = vpop.f32.mrb[0].mxu0
      %v660 = vadd.f32 0.0, %v659
      %v661 = vpop.f32.mrb[0].mxu0
      %v662 = vpop.f32.mrb[0].mxu0
      %v663 = vadd.f32 0.0, %v662
      %v664 = vpop.f32.mrb[0].mxu0
      %665 = vmatprep.mubr.bf16.mxu0 0
      %666 = vmatmul.mubr.bf16.gmra.mrb[0].mxu0 %v507
      %v667 = vpop.f32.mrb[0].mxu0
      %v668 = vadd.f32 0.0, %v667
      %v669 = vpop.f32.mrb[0].mxu0
      %v670 = vpop.f32.mrb[0].mxu0
      %v671 = vadd.f32 0.0, %v670
      %v672 = vpop.f32.mrb[0].mxu0
      %673 = vdwg.mxu0
      %v674 = vadd.f32 %v296, %v548
      %v675 = vadd.f32 %v297, %v551
      %v676 = vadd.f32 %v298, %v556
      %v677 = vadd.f32 %v299, %v559
      %v678 = vadd.f32 %v300, %v564
      %v679 = vadd.f32 %v301, %v567
      %v680 = vadd.f32 %v302, %v572
      %v681 = vadd.f32 %v303, %v575
      %v682 = vadd.f32 %v304, %v580
      %v683 = vadd.f32 %v305, %v583
      %v684 = vadd.f32 %v306, %v588
      %v685 = vadd.f32 %v307, %v591
      %v686 = vadd.f32 %v308, %v596
      %v687 = vadd.f32 %v309, %v599
      %v688 = vadd.f32 %v310, %v604
      %v689 = vadd.f32 %v311, %v607
      %v690 = vadd.f32 %v312, %v612
      %v691 = vadd.f32 %v313, %v615
      %v692 = vadd.f32 %v314, %v620
      %v693 = vadd.f32 %v315, %v623
      %v694 = vadd.f32 %v316, %v628
      %v695 = vadd.f32 %v317, %v631
      %v696 = vadd.f32 %v318, %v636
      %v697 = vadd.f32 %v319, %v639
      %v698 = vadd.f32 %v320, %v644
      %v699 = vadd.f32 %v321, %v647
      %v700 = vadd.f32 %v322, %v652
      %v701 = vadd.f32 %v323, %v655
      %v702 = vadd.f32 %v324, %v660
      %v703 = vadd.f32 %v325, %v663
      %v704 = vadd.f32 %v326, %v668
      %v705 = vadd.f32 %v327, %v671
      %706 = vst [vmem:[#allocation2] sm:$0xff] %v674
      %707 = vst [vmem:[#allocation2 + $0x8] sm:$0xff] %v675
      %708 = vst [vmem:[#allocation2 + $0x10] sm:$0xff] %v676
      %709 = vst [vmem:[#allocation2 + $0x18] sm:$0xff] %v677
      %710 = vst [vmem:[#allocation2 + $0x20] sm:$0xff] %v678
      %711 = vst [vmem:[#allocation2 + $0x28] sm:$0xff] %v679
      %712 = vst [vmem:[#allocation2 + $0x30] sm:$0xff] %v680
      %713 = vst [vmem:[#allocation2 + $0x38] sm:$0xff] %v681
      %714 = vst [vmem:[#allocation2 + $0x40] sm:$0xff] %v682
      %715 = vst [vmem:[#allocation2 + $0x48] sm:$0xff] %v683
      %716 = vst [vmem:[#allocation2 + $0x50] sm:$0xff] %v684
      %717 = vst [vmem:[#allocation2 + $0x58] sm:$0xff] %v685
      %718 = vst [vmem:[#allocation2 + $0x60] sm:$0xff] %v686
      %719 = vst [vmem:[#allocation2 + $0x68] sm:$0xff] %v687
      %720 = vst [vmem:[#allocation2 + $0x70] sm:$0xff] %v688
      %721 = vst [vmem:[#allocation2 + $0x78] sm:$0xff] %v689
      %722 = vst [vmem:[#allocation2 + $0x80] sm:$0xff] %v690
      %723 = vst [vmem:[#allocation2 + $0x88] sm:$0xff] %v691
      %724 = vst [vmem:[#allocation2 + $0x90] sm:$0xff] %v692
      %725 = vst [vmem:[#allocation2 + $0x98] sm:$0xff] %v693
      %726 = vst [vmem:[#allocation2 + $0xa0] sm:$0xff] %v694
      %727 = vst [vmem:[#allocation2 + $0xa8] sm:$0xff] %v695
      %728 = vst [vmem:[#allocation2 + $0xb0] sm:$0xff] %v696
      %729 = vst [vmem:[#allocation2 + $0xb8] sm:$0xff] %v697
      %730 = vst [vmem:[#allocation2 + $0xc0] sm:$0xff] %v698
      %731 = vst [vmem:[#allocation2 + $0xc8] sm:$0xff] %v699
      %732 = vst [vmem:[#allocation2 + $0xd0] sm:$0xff] %v700
      %733 = vst [vmem:[#allocation2 + $0xd8] sm:$0xff] %v701
      %734 = vst [vmem:[#allocation2 + $0xe0] sm:$0xff] %v702
      %735 = vst [vmem:[#allocation2 + $0xe8] sm:$0xff] %v703
      %736 = vst [vmem:[#allocation2 + $0xf0] sm:$0xff] %v704
      %737 = vst [vmem:[#allocation2 + $0xf8] sm:$0xff] %v705
      // Predicated region
      $region37: #{basic_conv2d.1} parent=31 // pred_check
        %p738 = pneg %p260
      $region38: #{basic_conv2d.1} parent=31 // pred_check_branch
        %740 = sbr.rel (%p738) target = $region40
      $region39: #{basic_conv2d.1} parent=31 // pred_region
        %v741 = vld [vmem:[#allocation2] sm:$0xff]
        %v742 = vld [vmem:[#allocation2 + $0x8] sm:$0xff]
        %v743 = vld [vmem:[#allocation2 + $0x10] sm:$0xff]
        %v744 = vld [vmem:[#allocation2 + $0x18] sm:$0xff]
        %v745 = vld [vmem:[#allocation2 + $0x20] sm:$0xff]
        %v746 = vld [vmem:[#allocation2 + $0x28] sm:$0xff]
        %v747 = vld [vmem:[#allocation2 + $0x30] sm:$0xff]
        %v748 = vld [vmem:[#allocation2 + $0x38] sm:$0xff]
        %v749 = vld [vmem:[#allocation2 + $0x40] sm:$0xff]
        %v750 = vld [vmem:[#allocation2 + $0x48] sm:$0xff]
        %v751 = vld [vmem:[#allocation2 + $0x50] sm:$0xff]
        %v752 = vld [vmem:[#allocation2 + $0x58] sm:$0xff]
        %v753 = vld [vmem:[#allocation2 + $0x60] sm:$0xff]
        %v754 = vld [vmem:[#allocation2 + $0x68] sm:$0xff]
        %v755 = vld [vmem:[#allocation2 + $0x70] sm:$0xff]
        %v756 = vld [vmem:[#allocation2 + $0x78] sm:$0xff]
        %v757 = vld [vmem:[#allocation2 + $0x80] sm:$0xff]
        %v758 = vld [vmem:[#allocation2 + $0x88] sm:$0xff]
        %v759 = vld [vmem:[#allocation2 + $0x90] sm:$0xff]
        %v760 = vld [vmem:[#allocation2 + $0x98] sm:$0xff]
        %v761 = vld [vmem:[#allocation2 + $0xa0] sm:$0xff]
        %v762 = vld [vmem:[#allocation2 + $0xa8] sm:$0xff]
        %v763 = vld [vmem:[#allocation2 + $0xb0] sm:$0xff]
        %v764 = vld [vmem:[#allocation2 + $0xb8] sm:$0xff]
        %v765 = vld [vmem:[#allocation2 + $0xc0] sm:$0xff]
        %v766 = vld [vmem:[#allocation2 + $0xc8] sm:$0xff]
        %v767 = vld [vmem:[#allocation2 + $0xd0] sm:$0xff]
        %v768 = vld [vmem:[#allocation2 + $0xd8] sm:$0xff]
        %v769 = vld [vmem:[#allocation2 + $0xe0] sm:$0xff]
        %v770 = vld [vmem:[#allocation2 + $0xe8] sm:$0xff]
        %v771 = vld [vmem:[#allocation2 + $0xf0] sm:$0xff]
        %v772 = vld [vmem:[#allocation2 + $0xf8] sm:$0xff]
        %v773 = vld [vmem:[%s249] sm:$0x1]
        %v775 = vlaneseq
        %v776 = vshrl.u32 %v775, 7
        %v777 = vsub.s32 0, %v776
        %v778 = vrot.slane %v773, %v777
        %v780 = vadd.f32 %v741, %v778
        %v781 = vadd.f32 %v742, %v778
        %v782 = vadd.f32 %v743, %v778
        %v783 = vadd.f32 %v744, %v778
        %v784 = vadd.f32 %v745, %v778
        %v785 = vadd.f32 %v746, %v778
        %v786 = vadd.f32 %v747, %v778
        %v787 = vadd.f32 %v748, %v778
        %v788 = vadd.f32 %v749, %v778
        %v789 = vadd.f32 %v750, %v778
        %v790 = vadd.f32 %v751, %v778
        %v791 = vadd.f32 %v752, %v778
        %v792 = vadd.f32 %v753, %v778
        %v793 = vadd.f32 %v754, %v778
        %v794 = vadd.f32 %v755, %v778
        %v795 = vadd.f32 %v756, %v778
        %v796 = vadd.f32 %v757, %v778
        %v797 = vadd.f32 %v758, %v778
        %v798 = vadd.f32 %v759, %v778
        %v799 = vadd.f32 %v760, %v778
        %v800 = vadd.f32 %v761, %v778
        %v801 = vadd.f32 %v762, %v778
        %v802 = vadd.f32 %v763, %v778
        %v803 = vadd.f32 %v764, %v778
        %v804 = vadd.f32 %v765, %v778
        %v805 = vadd.f32 %v766, %v778
        %v806 = vadd.f32 %v767, %v778
        %v807 = vadd.f32 %v768, %v778
        %v808 = vadd.f32 %v769, %v778
        %v809 = vadd.f32 %v770, %v778
        %v810 = vadd.f32 %v771, %v778
        %v811 = vadd.f32 %v772, %v778
        %v812 = vmin.f32 %v780, 20.0
        %v813 = vmin.f32 %v781, 20.0
        %v814 = vmin.f32 %v782, 20.0
        %v815 = vmin.f32 %v783, 20.0
        %v816 = vmin.f32 %v784, 20.0
        %v817 = vmin.f32 %v785, 20.0
        %v818 = vmin.f32 %v786, 20.0
        %v819 = vmin.f32 %v787, 20.0
        %v820 = vmin.f32 %v788, 20.0
        %v821 = vmin.f32 %v789, 20.0
        %v822 = vmin.f32 %v790, 20.0
        %v823 = vmin.f32 %v791, 20.0
        %v824 = vmin.f32 %v792, 20.0
        %v825 = vmin.f32 %v793, 20.0
        %v826 = vmin.f32 %v794, 20.0
        %v827 = vmin.f32 %v795, 20.0
        %v828 = vmin.f32 %v796, 20.0
        %v829 = vmin.f32 %v797, 20.0
        %v830 = vmin.f32 %v798, 20.0
        %v831 = vmin.f32 %v799, 20.0
        %v832 = vmin.f32 %v800, 20.0
        %v833 = vmin.f32 %v801, 20.0
        %v834 = vmin.f32 %v802, 20.0
        %v835 = vmin.f32 %v803, 20.0
        %v836 = vmin.f32 %v804, 20.0
        %v837 = vmin.f32 %v805, 20.0
        %v838 = vmin.f32 %v806, 20.0
        %v839 = vmin.f32 %v807, 20.0
        %v840 = vmin.f32 %v808, 20.0
        %v841 = vmin.f32 %v809, 20.0
        %v842 = vmin.f32 %v810, 20.0
        %v843 = vmin.f32 %v811, 20.0
        %v844 = vmul.f32 %v812, 1.442695
        %v845 = vpow.pop %v844
        %v846 = vmul.f32 %v813, 1.442695
        %v847 = vpow.pop %v846
        %v848 = vmul.f32 %v814, 1.442695
        %v849 = vpow.pop %v848
        %v850 = vmul.f32 %v815, 1.442695
        %v851 = vpow.pop %v850
        %v852 = vmul.f32 %v816, 1.442695
        %v853 = vpow.pop %v852
        %v854 = vmul.f32 %v817, 1.442695
        %v855 = vpow.pop %v854
        %v856 = vmul.f32 %v818, 1.442695
        %v857 = vpow.pop %v856
        %v858 = vmul.f32 %v819, 1.442695
        %v859 = vpow.pop %v858
        %v860 = vmul.f32 %v820, 1.442695
        %v861 = vpow.pop %v860
        %v862 = vmul.f32 %v821, 1.442695
        %v863 = vpow.pop %v862
        %v864 = vmul.f32 %v822, 1.442695
        %v865 = vpow.pop %v864
        %v866 = vmul.f32 %v823, 1.442695
        %v867 = vpow.pop %v866
        %v868 = vmul.f32 %v824, 1.442695
        %v869 = vpow.pop %v868
        %v870 = vmul.f32 %v825, 1.442695
        %v871 = vpow.pop %v870
        %v872 = vmul.f32 %v826, 1.442695
        %v873 = vpow.pop %v872
        %v874 = vmul.f32 %v827, 1.442695
        %v875 = vpow.pop %v874
        %v876 = vmul.f32 %v828, 1.442695
        %v877 = vpow.pop %v876
        %v878 = vmul.f32 %v829, 1.442695
        %v879 = vpow.pop %v878
        %v880 = vmul.f32 %v830, 1.442695
        %v881 = vpow.pop %v880
        %v882 = vmul.f32 %v831, 1.442695
        %v883 = vpow.pop %v882
        %v884 = vmul.f32 %v832, 1.442695
        %v885 = vpow.pop %v884
        %v886 = vmul.f32 %v833, 1.442695
        %v887 = vpow.pop %v886
        %v888 = vmul.f32 %v834, 1.442695
        %v889 = vpow.pop %v888
        %v890 = vmul.f32 %v835, 1.442695
        %v891 = vpow.pop %v890
        %v892 = vmul.f32 %v836, 1.442695
        %v893 = vpow.pop %v892
        %v894 = vmul.f32 %v837, 1.442695
        %v895 = vpow.pop %v894
        %v896 = vmul.f32 %v838, 1.442695
        %v897 = vpow.pop %v896
        %v898 = vmul.f32 %v839, 1.442695
        %v899 = vpow.pop %v898
        %v900 = vmul.f32 %v840, 1.442695
        %v901 = vpow.pop %v900
        %v902 = vmul.f32 %v841, 1.442695
        %v903 = vpow.pop %v902
        %v904 = vmul.f32 %v842, 1.442695
        %v905 = vpow.pop %v904
        %v906 = vmul.f32 %v843, 1.442695
        %v907 = vpow.pop %v906
        %v908 = vadd.f32 %v845, 2.0
        %v909 = vadd.f32 %v847, 2.0
        %v910 = vadd.f32 %v849, 2.0
        %v911 = vadd.f32 %v851, 2.0
        %v912 = vadd.f32 %v853, 2.0
        %v913 = vadd.f32 %v855, 2.0
        %v914 = vadd.f32 %v857, 2.0
        %v915 = vadd.f32 %v859, 2.0
        %v916 = vadd.f32 %v861, 2.0
        %v917 = vadd.f32 %v863, 2.0
        %v918 = vadd.f32 %v865, 2.0
        %v919 = vadd.f32 %v867, 2.0
        %v920 = vadd.f32 %v869, 2.0
        %v921 = vadd.f32 %v871, 2.0
        %v922 = vadd.f32 %v873, 2.0
        %v923 = vadd.f32 %v875, 2.0
        %v924 = vadd.f32 %v877, 2.0
        %v925 = vadd.f32 %v879, 2.0
        %v926 = vadd.f32 %v881, 2.0
        %v927 = vadd.f32 %v883, 2.0
        %v928 = vadd.f32 %v885, 2.0
        %v929 = vadd.f32 %v887, 2.0
        %v930 = vadd.f32 %v889, 2.0
        %v931 = vadd.f32 %v891, 2.0
        %v932 = vadd.f32 %v893, 2.0
        %v933 = vadd.f32 %v895, 2.0
        %v934 = vadd.f32 %v897, 2.0
        %v935 = vadd.f32 %v899, 2.0
        %v936 = vadd.f32 %v901, 2.0
        %v937 = vadd.f32 %v903, 2.0
        %v938 = vadd.f32 %v905, 2.0
        %v939 = vadd.f32 %v907, 2.0
        %v940 = vmul.f32 %v845, %v908
        %v941 = vmul.f32 %v847, %v909
        %v942 = vmul.f32 %v849, %v910
        %v943 = vmul.f32 %v851, %v911
        %v944 = vmul.f32 %v853, %v912
        %v945 = vmul.f32 %v855, %v913
        %v946 = vmul.f32 %v857, %v914
        %v947 = vmul.f32 %v859, %v915
        %v948 = vmul.f32 %v861, %v916
        %v949 = vmul.f32 %v863, %v917
        %v950 = vmul.f32 %v865, %v918
        %v951 = vmul.f32 %v867, %v919
        %v952 = vmul.f32 %v869, %v920
        %v953 = vmul.f32 %v871, %v921
        %v954 = vmul.f32 %v873, %v922
        %v955 = vmul.f32 %v875, %v923
        %v956 = vmul.f32 %v877, %v924
        %v957 = vmul.f32 %v879, %v925
        %v958 = vmul.f32 %v881, %v926
        %v959 = vmul.f32 %v883, %v927
        %v960 = vmul.f32 %v885, %v928
        %v961 = vmul.f32 %v887, %v929
        %v962 = vmul.f32 %v889, %v930
        %v963 = vmul.f32 %v891, %v931
        %v964 = vmul.f32 %v893, %v932
        %v965 = vmul.f32 %v895, %v933
        %v966 = vmul.f32 %v897, %v934
        %v967 = vmul.f32 %v899, %v935
        %v968 = vmul.f32 %v901, %v936
        %v969 = vmul.f32 %v903, %v937
        %v970 = vmul.f32 %v905, %v938
        %v971 = vmul.f32 %v907, %v939
        %v972 = vadd.f32 %v940, 2.0
        %v973 = vadd.f32 %v941, 2.0
        %v974 = vadd.f32 %v942, 2.0
        %v975 = vadd.f32 %v943, 2.0
        %v976 = vadd.f32 %v944, 2.0
        %v977 = vadd.f32 %v945, 2.0
        %v978 = vadd.f32 %v946, 2.0
        %v979 = vadd.f32 %v947, 2.0
        %v980 = vadd.f32 %v948, 2.0
        %v981 = vadd.f32 %v949, 2.0
        %v982 = vadd.f32 %v950, 2.0
        %v983 = vadd.f32 %v951, 2.0
        %v984 = vadd.f32 %v952, 2.0
        %v985 = vadd.f32 %v953, 2.0
        %v986 = vadd.f32 %v954, 2.0
        %v987 = vadd.f32 %v955, 2.0
        %v988 = vadd.f32 %v956, 2.0
        %v989 = vadd.f32 %v957, 2.0
        %v990 = vadd.f32 %v958, 2.0
        %v991 = vadd.f32 %v959, 2.0
        %v992 = vadd.f32 %v960, 2.0
        %v993 = vadd.f32 %v961, 2.0
        %v994 = vadd.f32 %v962, 2.0
        %v995 = vadd.f32 %v963, 2.0
        %v996 = vadd.f32 %v964, 2.0
        %v997 = vadd.f32 %v965, 2.0
        %v998 = vadd.f32 %v966, 2.0
        %v999 = vadd.f32 %v967, 2.0
        %v1000 = vadd.f32 %v968, 2.0
        %v1001 = vadd.f32 %v969, 2.0
        %v1002 = vadd.f32 %v970, 2.0
        %v1003 = vadd.f32 %v971, 2.0
        %v1004 = vrcp.pop %v972
        %v1005 = vmul.f32 %v940, %v1004
        %v1006 = vrcp.pop %v973
        %v1007 = vmul.f32 %v941, %v1006
        %v1008 = vrcp.pop %v974
        %v1009 = vmul.f32 %v942, %v1008
        %v1010 = vrcp.pop %v975
        %v1011 = vmul.f32 %v943, %v1010
        %v1012 = vrcp.pop %v976
        %v1013 = vmul.f32 %v944, %v1012
        %v1014 = vrcp.pop %v977
        %v1015 = vmul.f32 %v945, %v1014
        %v1016 = vrcp.pop %v978
        %v1017 = vmul.f32 %v946, %v1016
        %v1018 = vrcp.pop %v979
        %v1019 = vmul.f32 %v947, %v1018
        %v1020 = vrcp.pop %v980
        %v1021 = vmul.f32 %v948, %v1020
        %v1022 = vrcp.pop %v981
        %v1023 = vmul.f32 %v949, %v1022
        %v1024 = vrcp.pop %v982
        %v1025 = vmul.f32 %v950, %v1024
        %v1026 = vrcp.pop %v983
        %v1027 = vmul.f32 %v951, %v1026
        %v1028 = vrcp.pop %v984
        %v1029 = vmul.f32 %v952, %v1028
        %v1030 = vrcp.pop %v985
        %v1031 = vmul.f32 %v953, %v1030
        %v1032 = vrcp.pop %v986
        %v1033 = vmul.f32 %v954, %v1032
        %v1034 = vrcp.pop %v987
        %v1035 = vmul.f32 %v955, %v1034
        %v1036 = vrcp.pop %v988
        %v1037 = vmul.f32 %v956, %v1036
        %v1038 = vrcp.pop %v989
        %v1039 = vmul.f32 %v957, %v1038
        %v1040 = vrcp.pop %v990
        %v1041 = vmul.f32 %v958, %v1040
        %v1042 = vrcp.pop %v991
        %v1043 = vmul.f32 %v959, %v1042
        %v1044 = vrcp.pop %v992
        %v1045 = vmul.f32 %v960, %v1044
        %v1046 = vrcp.pop %v993
        %v1047 = vmul.f32 %v961, %v1046
        %v1048 = vrcp.pop %v994
        %v1049 = vmul.f32 %v962, %v1048
        %v1050 = vrcp.pop %v995
        %v1051 = vmul.f32 %v963, %v1050
        %v1052 = vrcp.pop %v996
        %v1053 = vmul.f32 %v964, %v1052
        %v1054 = vrcp.pop %v997
        %v1055 = vmul.f32 %v965, %v1054
        %v1056 = vrcp.pop %v998
        %v1057 = vmul.f32 %v966, %v1056
        %v1058 = vrcp.pop %v999
        %v1059 = vmul.f32 %v967, %v1058
        %v1060 = vrcp.pop %v1000
        %v1061 = vmul.f32 %v968, %v1060
        %v1062 = vrcp.pop %v1001
        %v1063 = vmul.f32 %v969, %v1062
        %v1064 = vrcp.pop %v1002
        %v1065 = vmul.f32 %v970, %v1064
        %v1066 = vrcp.pop %v1003
        %v1067 = vmul.f32 %v971, %v1066
        %v1068 = vmul.f32 %v780, %v1005
        %v1069 = vmul.f32 %v781, %v1007
        %v1070 = vmul.f32 %v782, %v1009
        %v1071 = vmul.f32 %v783, %v1011
        %v1072 = vmul.f32 %v784, %v1013
        %v1073 = vmul.f32 %v785, %v1015
        %v1074 = vmul.f32 %v786, %v1017
        %v1075 = vmul.f32 %v787, %v1019
        %v1076 = vmul.f32 %v788, %v1021
        %v1077 = vmul.f32 %v789, %v1023
        %v1078 = vmul.f32 %v790, %v1025
        %v1079 = vmul.f32 %v791, %v1027
        %v1080 = vmul.f32 %v792, %v1029
        %v1081 = vmul.f32 %v793, %v1031
        %v1082 = vmul.f32 %v794, %v1033
        %v1083 = vmul.f32 %v795, %v1035
        %v1084 = vmul.f32 %v796, %v1037
        %v1085 = vmul.f32 %v797, %v1039
        %v1086 = vmul.f32 %v798, %v1041
        %v1087 = vmul.f32 %v799, %v1043
        %v1088 = vmul.f32 %v800, %v1045
        %v1089 = vmul.f32 %v801, %v1047
        %v1090 = vmul.f32 %v802, %v1049
        %v1091 = vmul.f32 %v803, %v1051
        %v1092 = vmul.f32 %v804, %v1053
        %v1093 = vmul.f32 %v805, %v1055
        %v1094 = vmul.f32 %v806, %v1057
        %v1095 = vmul.f32 %v807, %v1059
        %v1096 = vmul.f32 %v808, %v1061
        %v1097 = vmul.f32 %v809, %v1063
        %v1098 = vmul.f32 %v810, %v1065
        %v1099 = vmul.f32 %v811, %v1067
        %1100 = vst [vmem:[%s257] sm:$0xff] %v1068
        %1101 = vst [vmem:[%s257 + $0x8] sm:$0xff] %v1069
        %1102 = vst [vmem:[%s257 + $0x10] sm:$0xff] %v1070
        %1103 = vst [vmem:[%s257 + $0x18] sm:$0xff] %v1071
        %1104 = vst [vmem:[%s257 + $0x20] sm:$0xff] %v1072
        %1105 = vst [vmem:[%s257 + $0x28] sm:$0xff] %v1073
        %1106 = vst [vmem:[%s257 + $0x30] sm:$0xff] %v1074
        %1107 = vst [vmem:[%s257 + $0x38] sm:$0xff] %v1075
        %1108 = vst [vmem:[%s257 + $0x40] sm:$0xff] %v1076
        %1109 = vst [vmem:[%s257 + $0x48] sm:$0xff] %v1077
        %1110 = vst [vmem:[%s257 + $0x50] sm:$0xff] %v1078
        %1111 = vst [vmem:[%s257 + $0x58] sm:$0xff] %v1079
        %1112 = vst [vmem:[%s257 + $0x60] sm:$0xff] %v1080
        %1113 = vst [vmem:[%s257 + $0x68] sm:$0xff] %v1081
        %1114 = vst [vmem:[%s257 + $0x70] sm:$0xff] %v1082
        %1115 = vst [vmem:[%s257 + $0x78] sm:$0xff] %v1083
        %1116 = vst [vmem:[%s257 + $0x80] sm:$0xff] %v1084
        %1117 = vst [vmem:[%s257 + $0x88] sm:$0xff] %v1085
        %1118 = vst [vmem:[%s257 + $0x90] sm:$0xff] %v1086
        %1119 = vst [vmem:[%s257 + $0x98] sm:$0xff] %v1087
        %1120 = vst [vmem:[%s257 + $0xa0] sm:$0xff] %v1088
        %1121 = vst [vmem:[%s257 + $0xa8] sm:$0xff] %v1089
        %1122 = vst [vmem:[%s257 + $0xb0] sm:$0xff] %v1090
        %1123 = vst [vmem:[%s257 + $0xb8] sm:$0xff] %v1091
        %1124 = vst [vmem:[%s257 + $0xc0] sm:$0xff] %v1092
        %1125 = vst [vmem:[%s257 + $0xc8] sm:$0xff] %v1093
        %1126 = vst [vmem:[%s257 + $0xd0] sm:$0xff] %v1094
        %1127 = vst [vmem:[%s257 + $0xd8] sm:$0xff] %v1095
        %1128 = vst [vmem:[%s257 + $0xe0] sm:$0xff] %v1096
        %1129 = vst [vmem:[%s257 + $0xe8] sm:$0xff] %v1097
        %1130 = vst [vmem:[%s257 + $0xf0] sm:$0xff] %v1098
        %1131 = vst [vmem:[%s257 + $0xf8] sm:$0xff] %v1099
      $region40: #{basic_conv2d.1} parent=31 // pred_fallthru
        _
      %s1132 = smul.u32 32, %s19
      %p1133 = scmp.lt.s32.totalorder %s1132, 63
      %s1134 = scalar_select %p1133, %s1132, 63
      %p1135 = scmp.lt.s32.totalorder %s20, 0
      %s1136 = scalar_select %p1135, %s20, 0
      %s1137 = sadd.s32 %s1136, %s1134
      %s1138 = smul.addr %s1137, 8
      %s1139 = scalar_lea.vmem %s3, %s1138
      // Predicated region
      $region41: #{basic_conv2d.1} parent=31 // pred_check
        %p1140 = pneg %p135
      $region42: #{basic_conv2d.1} parent=31 // pred_check_branch
        %1142 = sbr.rel (%p1140) target = $region44
      $region43: #{basic_conv2d.1} parent=31 // pred_region
        %s1143 = smul.u32 32, %s19
      $region44: #{basic_conv2d.1} parent=31 // pred_fallthru
        _
    $region32: #{basic_conv2d.1} parent=5 // pred_fallthru
      _
    %p1144 = scmp.le.s32.totalorder 2, %s9
    // Predicated region
    $region45: #{basic_conv2d.1} parent=5 // pred_check
      %p1145 = pneg %p1144
    $region46: #{basic_conv2d.1} parent=5 // pred_check_branch
      %1147 = sbr.rel (%p1145) target = $region48
    $region47: #{basic_conv2d.1} parent=5 // pred_region
      %s1148 = ssub.s32 %s9, 2
      // Predicated region
      $region49: #{basic_conv2d.1} parent=47 // pred_check
        %p1149 = pneg %p141
      $region50: #{basic_conv2d.1} parent=47 // pred_check_branch
        %1151 = sbr.rel (%p1149) target = $region52
      $region51: #{basic_conv2d.1} parent=47 // pred_region
        %s1152 = smul.u32 32, %s22
        %p1153 = scmp.lt.s32.totalorder %s1152, 63
        %s1154 = scalar_select %p1153, %s1152, 63
        %p1155 = scmp.lt.s32.totalorder %s23, 0
        %s1156 = scalar_select %p1155, %s23, 0
        %s1157 = sadd.s32 %s1156, %s1154
        %s1158 = smul.addr %s1157, 8
        %s1159 = scalar_lea.vmem %s3, %s1158
      $region52: #{basic_conv2d.1} parent=47 // pred_fallthru
        _
    $region48: #{basic_conv2d.1} parent=5 // pred_fallthru
      _
  $region6: #{basic_conv2d.1} parent=0 // loop_footer
    %s13 = sadd.s32 1, %s9
  $region7: #{basic_conv2d.1} parent=0 // loop_footer_branch
    %8 = sbr.rel target = $region3
  $region8: #{basic_conv2d.1} parent=0 // loop_exit
    _

</llo_original>
